<compile_context>
chip_gen: v7x
topology: tpu7x:2x2x1
jax: 0.10.0
libtpu: 0.0.40
codegen_flags: <defaults>
</compile_context>

<pallas_src>
import functools

import jax
import jax.numpy as jnp
from jax.experimental import pallas as pl
from jax.experimental.pallas import tpu as pltpu


def _point_score_kernel(x_ref, w1_ref, b1_ref, w2_ref, b2_ref, o_ref):
    # x_ref:  (TM, D) bf16 tile of points
    # w1_ref: (D, D)  bf16  (W1^T, so the matmul is plain row-major)
    # b1_ref: (1, D)  f32
    # w2_ref: (1, D)  f32   (W2 as a row)
    # b2_ref: (1, 1)  f32
    # o_ref:  (TM, 1) f32
    # mlp1 on the MXU: bf16 inputs, f32 accumulation.
    h = jnp.dot(x_ref[...], w1_ref[...], preferred_element_type=jnp.float32)
    h = h + b1_ref[...]
    # leaky_relu (PyTorch default negative_slope = 0.01), f32 on the VPU.
    h = jnp.where(h > 0, h, 0.01 * h)

    # Dropout with p=0.0 in eval mode is the identity.
    # TODO(synk): training-mode dropout (stateful PRNG mask) not implemented.

    # mlp2: (TM, D) -> (TM, 1) as a VPU multiply + lane reduction (avoids a
    # column-1 MXU matmul that would waste nearly the whole MXU pass).
    z = jnp.sum(h * w2_ref[...], axis=-1, keepdims=True) + b2_ref[...]
    o_ref[...] = jax.nn.sigmoid(z).astype(o_ref.dtype)


def _round_up(x, m):
    return ((x + m - 1) // m) * m


def _cap_tile_for_vmem(tile_m, d, budget_bytes=12 * 1024 * 1024):
    """Largest row-tile whose double-buffered working set fits a conservative
    VMEM budget (safe under v5e's 16 MiB and v7x's 32 MiB default scoped limits)."""
    per_row = 2 * d * 2 + d * 4 + 2 * 4          # 2x bf16 x rows + f32 h + out
    fixed = 2 * (d * d * 2 + 2 * d * 4 + 8)      # (double-buffered) weights/biases
    cap = max(8, (budget_bytes - fixed) // per_row)
    cap = max(8, (cap // 8) * 8)
    return min(tile_m, cap)


@functools.partial(jax.jit, static_argnames=("tile_m",))
def point_score_forward(feats, w1_t, b1, w2_row, b2, *, tile_m=1024):
    """feats: (B, N, D). w1_t: (D, D) = W1^T. b1: (1, D). w2_row: (1, D) = W2.
    b2: (1, 1). Returns sigmoid scores of shape (B, N, 1), float32."""
    B, N, D = feats.shape
    M = B * N

    # Dominant HBM streams go in bf16 (ideally the producer already emits bf16;
    # the cast here is a no-op in that case).
    x = feats.reshape(M, D).astype(jnp.bfloat16)
    w1_bf16 = w1_t.astype(jnp.bfloat16)
    b1 = b1.astype(jnp.float32)
    w2_row = w2_row.astype(jnp.float32)
    b2 = b2.astype(jnp.float32)

    # Pick the row tile: as large as VMEM allows, never larger than the
    # (sublane-aligned) problem, and no full-slab padding in HBM — the ragged
    # last block is masked by Pallas.
    tile_m_eff = _cap_tile_for_vmem(tile_m, D)
    tile_m_eff = min(tile_m_eff, max(8, _round_up(M, 8)))
    num_tiles = pl.cdiv(M, tile_m_eff)

    out = pl.pallas_call(
        _point_score_kernel,
        out_shape=jax.ShapeDtypeStruct((M, 1), jnp.float32),
        grid_spec=pltpu.PrefetchScalarGridSpec(
            num_scalar_prefetch=0,
            grid=(num_tiles,),
            in_specs=[
                pl.BlockSpec((tile_m_eff, D), lambda i: (i, 0)),  # x tile
                pl.BlockSpec((D, D), lambda i: (0, 0)),           # W1^T (full)
                pl.BlockSpec((1, D), lambda i: (0, 0)),           # b1
                pl.BlockSpec((1, D), lambda i: (0, 0)),           # W2 row
                pl.BlockSpec((1, 1), lambda i: (0, 0)),           # b2
            ],
            out_specs=pl.BlockSpec((tile_m_eff, 1), lambda i: (i, 0)),
        ),
        compiler_params=pltpu.CompilerParams(
            dimension_semantics=("parallel",),   # megacore-shardable on v7x
        ),
    )(x, w1_bf16, b1, w2_row, b2)

    return out.reshape(B, N, 1)


def init_params(key, feat_dim):
    """Deterministic synthetic init mimicking nn.Linear's uniform(-1/sqrt(fan_in), ...)."""
    k1, k2, k3, k4 = jax.random.split(key, 4)
    bound1 = 1.0 / jnp.sqrt(feat_dim)
    # W1: (out=D, in=D) in PyTorch convention; we store the transpose (in, out).
    w1_t = jax.random.uniform(k1, (feat_dim, feat_dim), jnp.float32, -bound1, bound1)
    b1 = jax.random.uniform(k2, (1, feat_dim), jnp.float32, -bound1, bound1)
    # W2: (out=1, in=D) in PyTorch convention; already the row layout we want.
    w2_row = jax.random.uniform(k3, (1, feat_dim), jnp.float32, -bound1, bound1)
    b2 = jax.random.uniform(k4, (1, 1), jnp.float32, -bound1, bound1)
    return w1_t, b1, w2_row, b2


def _reference(feats, w1_t, b1, w2_row, b2):
    """Pure-JAX reference with the same bf16 input rounding as the kernel."""
    B, N, D = feats.shape
    x = feats.reshape(-1, D).astype(jnp.bfloat16).astype(jnp.float32)
    w1 = w1_t.astype(jnp.bfloat16).astype(jnp.float32)
    h = jnp.dot(x, w1, precision=jax.lax.Precision.HIGHEST) + b1
    h = jnp.where(h > 0, h, 0.01 * h)
    z = jnp.sum(h * w2_row, axis=-1, keepdims=True) + b2
    return jax.nn.sigmoid(z).reshape(B, N, 1)


if __name__ == "__main__":
    key = jax.random.PRNGKey(0)
    k_feat, k_param = jax.random.split(key)

    B, N, feat_dim = 2, 200, 32   # M = 400 is not a tile multiple -> ragged block path
    feats = jax.random.normal(k_feat, (B, N, feat_dim), dtype=jnp.float32)
    w1_t, b1, w2_row, b2 = init_params(k_param, feat_dim)

    out = point_score_forward(feats, w1_t, b1, w2_row, b2)
    out = jax.block_until_ready(out)

    ref = _reference(feats, w1_t, b1, w2_row, b2)
    assert out.shape == (B, N, 1), out.shape
    assert bool(jnp.all(jnp.isfinite(out)))
    assert jnp.allclose(out, ref, atol=1e-4, rtol=1e-4), float(jnp.abs(out - ref).max())

    print("KERNEL_OK")
</pallas_src>

<mosaic_0001>
module attributes {stable_mosaic.version = 11 : i64} {
  func.func @_point_score_kernel(%arg0: i32, %arg1: memref<400x32xbf16, #tpu.memory_space<vmem>>, %arg2: memref<32x32xbf16, #tpu.memory_space<vmem>>, %arg3: memref<1x32xf32, #tpu.memory_space<vmem>>, %arg4: memref<1x32xf32, #tpu.memory_space<vmem>>, %arg5: memref<1x1xf32, #tpu.memory_space<vmem>>, %arg6: memref<400x1xf32, #tpu.memory_space<vmem>>) attributes {dimension_semantics = [#tpu.dimension_semantics<parallel>], iteration_bounds = array<i64: 1>, scalar_prefetch = 0 : i64, scratch_operands = 0 : i64, tpu.core_type = #tpu.core_type<tc>, window_params = [{transform_indices = @transform_0, window_bounds = array<i64: 400, 32>}, {pipeline_mode = #tpu.pipeline_mode<synchronous>, transform_indices = @transform_1, window_bounds = array<i64: 32, 32>}, {pipeline_mode = #tpu.pipeline_mode<synchronous>, transform_indices = @transform_2, window_bounds = array<i64: 1, 32>}, {pipeline_mode = #tpu.pipeline_mode<synchronous>, transform_indices = @transform_3, window_bounds = array<i64: 1, 32>}, {pipeline_mode = #tpu.pipeline_mode<synchronous>, transform_indices = @transform_4, window_bounds = array<i64: 1, 1>}, {transform_indices = @transform_5, window_bounds = array<i64: 400, 1>}]} {
    %c0 = arith.constant 0 : index
    %c0_0 = arith.constant 0 : index
    %0 = vector.load %arg1[%c0, %c0_0] : memref<400x32xbf16, #tpu.memory_space<vmem>>, vector<400x32xbf16>
    %c0_1 = arith.constant 0 : index
    %c0_2 = arith.constant 0 : index
    %1 = vector.load %arg2[%c0_1, %c0_2] : memref<32x32xbf16, #tpu.memory_space<vmem>>, vector<32x32xbf16>
    %cst = arith.constant dense<0.000000e+00> : vector<400x32xf32>
    %2 = tpu.matmul %0, %1, %cst {dimension_numbers = #tpu.dot_dimension_numbers<[1], [0], [0], [1], [0, 0, 1, 1], [], []>} : vector<400x32xbf16>, vector<32x32xbf16>, vector<400x32xf32> -> vector<400x32xf32>
    %c0_3 = arith.constant 0 : index
    %c0_4 = arith.constant 0 : index
    %3 = vector.load %arg3[%c0_3, %c0_4] : memref<1x32xf32, #tpu.memory_space<vmem>>, vector<1x32xf32>
    %4 = vector.broadcast %3 : vector<1x32xf32> to vector<400x32xf32>
    %5 = arith.addf %2, %4 : vector<400x32xf32>
    %cst_5 = arith.constant 0.000000e+00 : f32
    %6 = vector.broadcast %cst_5 : f32 to vector<400x32xf32>
    %7 = arith.cmpf ogt, %5, %6 : vector<400x32xf32>
    %cst_6 = arith.constant 0.00999999977 : f32
    %8 = vector.broadcast %cst_6 : f32 to vector<400x32xf32>
    %9 = arith.mulf %8, %5 : vector<400x32xf32>
    %10 = arith.select %7, %5, %9 : vector<400x32xi1>, vector<400x32xf32>
    %c0_7 = arith.constant 0 : index
    %c0_8 = arith.constant 0 : index
    %11 = vector.load %arg4[%c0_7, %c0_8] : memref<1x32xf32, #tpu.memory_space<vmem>>, vector<1x32xf32>
    %12 = vector.broadcast %11 : vector<1x32xf32> to vector<400x32xf32>
    %13 = arith.mulf %10, %12 : vector<400x32xf32>
    %cst_9 = arith.constant dense<0.000000e+00> : vector<400xf32>
    %14 = vector.multi_reduction <add>, %13, %cst_9 [1] : vector<400x32xf32> to vector<400xf32>
    %15 = vector.shape_cast %14 : vector<400xf32> to vector<400x1xf32>
    %c0_10 = arith.constant 0 : index
    %c0_11 = arith.constant 0 : index
    %16 = vector.load %arg5[%c0_10, %c0_11] : memref<1x1xf32, #tpu.memory_space<vmem>>, vector<1x1xf32>
    %17 = vector.broadcast %16 : vector<1x1xf32> to vector<400x1xf32>
    %18 = arith.addf %15, %17 : vector<400x1xf32>
    %19 = arith.negf %18 : vector<400x1xf32>
    %20 = math.exp %19 : vector<400x1xf32>
    %cst_12 = arith.constant 1.000000e+00 : f32
    %21 = vector.broadcast %cst_12 : f32 to vector<400x1xf32>
    %22 = arith.addf %21, %20 : vector<400x1xf32>
    %23 = arith.divf %21, %22 : vector<400x1xf32>
    %c0_13 = arith.constant 0 : index
    %c0_14 = arith.constant 0 : index
    %24 = vector.load %arg6[%c0_13, %c0_14] : memref<400x1xf32, #tpu.memory_space<vmem>>, vector<400x1xf32>
    tpu.vector_store %arg6[%c0_13, %c0_14], %23 {strides = array<i32>} : memref<400x1xf32, #tpu.memory_space<vmem>>, vector<400x1xf32>,
    return
  }
  func.func @transform_0(%arg0: i32) -> (i32, i32) {
    %c0_i32 = arith.constant 0 : i32
    %c0_i32_0 = arith.constant 0 : i32
    return %arg0, %c0_i32 : i32, i32
  }
  func.func @transform_1(%arg0: i32) -> (i32, i32) {
    %c0_i32 = arith.constant 0 : i32
    %c0_i32_0 = arith.constant 0 : i32
    %c0_i32_1 = arith.constant 0 : i32
    return %c0_i32, %c0_i32_0 : i32, i32
  }
  func.func @transform_2(%arg0: i32) -> (i32, i32) {
    %c0_i32 = arith.constant 0 : i32
    %c0_i32_0 = arith.constant 0 : i32
    %c0_i32_1 = arith.constant 0 : i32
    return %c0_i32, %c0_i32_0 : i32, i32
  }
  func.func @transform_3(%arg0: i32) -> (i32, i32) {
    %c0_i32 = arith.constant 0 : i32
    %c0_i32_0 = arith.constant 0 : i32
    %c0_i32_1 = arith.constant 0 : i32
    return %c0_i32, %c0_i32_0 : i32, i32
  }
  func.func @transform_4(%arg0: i32) -> (i32, i32) {
    %c0_i32 = arith.constant 0 : i32
    %c0_i32_0 = arith.constant 0 : i32
    %c0_i32_1 = arith.constant 0 : i32
    return %c0_i32, %c0_i32_0 : i32, i32
  }
  func.func @transform_5(%arg0: i32) -> (i32, i32) {
    %c0_i32 = arith.constant 0 : i32
    %c0_i32_0 = arith.constant 0 : i32
    return %arg0, %c0_i32 : i32, i32
  }
}

</mosaic_0001>

<llo_original>
// kernel: point_score_forward.1
$region0: #{point_score_forward.1}
  #allocation0 [shape = 'u32[]', space=smem, size = 0x4, offset = 0x4, fixed_abs, tag = 'smem constant byte address 0x4 - core index']
  #allocation1 [shape = 'u32[144,128]{1,0:T(1,128)}', space=vmem, size = 0x12000, scoped, tag = 'internal scratch']
  #allocation2 [shape = 'f32[1,1]{1,0:T(1,128)S(1)}', space=vmem, size = 0x200, scoped, tag = 'scoped memory for point_score_forward.1']
  %s0 = inlined_call_operand.vmem [shape: bf16[400,32], index: 0, kind: input, shape index: {}]
  %s1 = inlined_call_operand.vmem [shape: bf16[32,32], index: 1, kind: input, shape index: {}]
  %s2 = inlined_call_operand.vmem [shape: f32[1,32], index: 2, kind: input, shape index: {}]
  %s3 = inlined_call_operand.vmem [shape: f32[1,32], index: 3, kind: input, shape index: {}]
  %s4 = inlined_call_operand.<no memory space> [shape: f32[1,1], index: 4, kind: input, shape index: {}]
  %s5 = inlined_call_operand.vmem [shape: f32[400,1], index: 5, kind: output, shape index: {}]
  %s6 = sld [smem:[#allocation0]]
  $region30: #{point_score_forward.1} parent=0
    _
  %s8 = ssub.s32 1, %s6
  %s9 = scalar_select 0, %s8, %s6
  %v10 = vstv %s4
  %11 = vst [vmem:[#allocation2] sm:$0x1] %v10
  // Predicated region
  $region2: #{point_score_forward.1} parent=0 // pred_check
    _
  $region3: #{point_score_forward.1} parent=0 // pred_check_branch
    %13 = sbr.rel (0) target = $region5
  $region4: #{point_score_forward.1} parent=0 // pred_region
    _
  $region5: #{point_score_forward.1} parent=0 // pred_fallthru
    _
  // Predicated region
  $region6: #{point_score_forward.1} parent=0 // pred_check
    _
  $region7: #{point_score_forward.1} parent=0 // pred_check_branch
    %15 = sbr.rel (0) target = $region9
  $region8: #{point_score_forward.1} parent=0 // pred_region
    _
  $region9: #{point_score_forward.1} parent=0 // pred_fallthru
    _
  // Predicated region
  $region10: #{point_score_forward.1} parent=0 // pred_check
    _
  $region11: #{point_score_forward.1} parent=0 // pred_check_branch
    %17 = sbr.rel (0) target = $region13
  $region12: #{point_score_forward.1} parent=0 // pred_region
    _
  $region13: #{point_score_forward.1} parent=0 // pred_fallthru
    _
  // Predicated region
  $region14: #{point_score_forward.1} parent=0 // pred_check
    _
  $region15: #{point_score_forward.1} parent=0 // pred_check_branch
    %19 = sbr.rel (0) target = $region17
  $region16: #{point_score_forward.1} parent=0 // pred_region
    _
  $region17: #{point_score_forward.1} parent=0 // pred_fallthru
    _
  // Predicated region
  $region18: #{point_score_forward.1} parent=0 // pred_check
    _
  $region19: #{point_score_forward.1} parent=0 // pred_check_branch
    %21 = sbr.rel (0) target = $region21
  $region20: #{point_score_forward.1} parent=0 // pred_region
    _
  $region21: #{point_score_forward.1} parent=0 // pred_fallthru
    _
  %v23 = vld [vmem:[%s0] sm:$0xf]
  %v24 = vld [vmem:[%s0 + $0x4] sm:$0xf]
  %v25 = vld [vmem:[%s0 + $0x8] sm:$0xf]
  %v26 = vld [vmem:[%s0 + $0xc] sm:$0xf]
  %v27 = vld [vmem:[%s0 + $0x10] sm:$0xf]
  %v28 = vld [vmem:[%s0 + $0x14] sm:$0xf]
  %v29 = vld [vmem:[%s0 + $0x18] sm:$0xf]
  %v30 = vld [vmem:[%s0 + $0x1c] sm:$0xf]
  %v31 = vld [vmem:[%s0 + $0x20] sm:$0xf]
  %v32 = vld [vmem:[%s0 + $0x24] sm:$0xf]
  %v33 = vld [vmem:[%s0 + $0x28] sm:$0xf]
  %v34 = vld [vmem:[%s0 + $0x2c] sm:$0xf]
  %v35 = vld [vmem:[%s0 + $0x30] sm:$0xf]
  %v36 = vld [vmem:[%s0 + $0x34] sm:$0xf]
  %v37 = vld [vmem:[%s0 + $0x38] sm:$0xf]
  %v38 = vld [vmem:[%s0 + $0x3c] sm:$0xf]
  %v39 = vld [vmem:[%s0 + $0x40] sm:$0xf]
  %v40 = vld [vmem:[%s0 + $0x44] sm:$0xf]
  %v41 = vld [vmem:[%s0 + $0x48] sm:$0xf]
  %v42 = vld [vmem:[%s0 + $0x4c] sm:$0xf]
  %v43 = vld [vmem:[%s0 + $0x50] sm:$0xf]
  %v44 = vld [vmem:[%s0 + $0x54] sm:$0xf]
  %v45 = vld [vmem:[%s0 + $0x58] sm:$0xf]
  %v46 = vld [vmem:[%s0 + $0x5c] sm:$0xf]
  %v47 = vld [vmem:[%s0 + $0x60] sm:$0xf]
  %v48 = vld [vmem:[%s0 + $0x64] sm:$0xf]
  %v49 = vld [vmem:[%s0 + $0x68] sm:$0xf]
  %v50 = vld [vmem:[%s0 + $0x6c] sm:$0xf]
  %v51 = vld [vmem:[%s0 + $0x70] sm:$0xf]
  %v52 = vld [vmem:[%s0 + $0x74] sm:$0xf]
  %v53 = vld [vmem:[%s0 + $0x78] sm:$0xf]
  %v54 = vld [vmem:[%s0 + $0x7c] sm:$0xf]
  %v55 = vld [vmem:[%s0 + $0x80] sm:$0xf]
  %v56 = vld [vmem:[%s0 + $0x84] sm:$0xf]
  %v57 = vld [vmem:[%s0 + $0x88] sm:$0xf]
  %v58 = vld [vmem:[%s0 + $0x8c] sm:$0xf]
  %v59 = vld [vmem:[%s0 + $0x90] sm:$0xf]
  %v60 = vld [vmem:[%s0 + $0x94] sm:$0xf]
  %v61 = vld [vmem:[%s0 + $0x98] sm:$0xf]
  %v62 = vld [vmem:[%s0 + $0x9c] sm:$0xf]
  %v63 = vld [vmem:[%s0 + $0xa0] sm:$0xf]
  %v64 = vld [vmem:[%s0 + $0xa4] sm:$0xf]
  %v65 = vld [vmem:[%s0 + $0xa8] sm:$0xf]
  %v66 = vld [vmem:[%s0 + $0xac] sm:$0xf]
  %v67 = vld [vmem:[%s0 + $0xb0] sm:$0xf]
  %v68 = vld [vmem:[%s0 + $0xb4] sm:$0xf]
  %v69 = vld [vmem:[%s0 + $0xb8] sm:$0xf]
  %v70 = vld [vmem:[%s0 + $0xbc] sm:$0xf]
  %v71 = vld [vmem:[%s0 + $0xc0] sm:$0xf]
  %v72 = vld [vmem:[%s0 + $0xc4] sm:$0xf]
  %v73 = vld [vmem:[%s1] sm:$0xf]
  %v74 = vld [vmem:[%s1 + $0x4] sm:$0xf]
  %v75 = vld [vmem:[%s1 + $0x8] sm:$0xf]
  %v76 = vld [vmem:[%s1 + $0xc] sm:$0xf]
  %v77 = vld [vmem:[%s2] sm:$0x1]
  %v79 = vlaneseq
  %v80 = vshrl.u32 %v79, 7
  %v81 = vsub.s32 0, %v80
  %v82 = vrot.slane %v77, %v81
  %v134 = vunpack.c.l.b16 %v23
  %v135 = vunpack.c.l.b16 %v24
  %v136 = vunpack.c.l.b16 %v25
  %v137 = vunpack.c.l.b16 %v26
  %v138 = vunpack.c.l.b16 %v27
  %v139 = vunpack.c.l.b16 %v28
  %v140 = vunpack.c.l.b16 %v29
  %v141 = vunpack.c.l.b16 %v30
  %v142 = vunpack.c.l.b16 %v31
  %v143 = vunpack.c.l.b16 %v32
  %v144 = vunpack.c.l.b16 %v33
  %v145 = vunpack.c.l.b16 %v34
  %v146 = vunpack.c.l.b16 %v35
  %v147 = vunpack.c.l.b16 %v36
  %v148 = vunpack.c.l.b16 %v37
  %v149 = vunpack.c.l.b16 %v38
  %v150 = vunpack.c.l.b16 %v39
  %v151 = vunpack.c.l.b16 %v40
  %v152 = vunpack.c.l.b16 %v41
  %v153 = vunpack.c.l.b16 %v42
  %v154 = vunpack.c.l.b16 %v43
  %v155 = vunpack.c.l.b16 %v44
  %v156 = vunpack.c.l.b16 %v45
  %v157 = vunpack.c.l.b16 %v46
  %v158 = vunpack.c.l.b16 %v47
  %v159 = vunpack.c.l.b16 %v48
  %v160 = vunpack.c.l.b16 %v49
  %v161 = vunpack.c.l.b16 %v50
  %v162 = vunpack.c.l.b16 %v51
  %v163 = vunpack.c.l.b16 %v52
  %v164 = vunpack.c.l.b16 %v53
  %v165 = vunpack.c.l.b16 %v54
  %v166 = vunpack.c.l.b16 %v55
  %v167 = vunpack.c.l.b16 %v56
  %v168 = vunpack.c.l.b16 %v57
  %v169 = vunpack.c.l.b16 %v58
  %v170 = vunpack.c.l.b16 %v59
  %v171 = vunpack.c.l.b16 %v60
  %v172 = vunpack.c.l.b16 %v61
  %v173 = vunpack.c.l.b16 %v62
  %v174 = vunpack.c.l.b16 %v63
  %v175 = vunpack.c.l.b16 %v64
  %v176 = vunpack.c.l.b16 %v65
  %v177 = vunpack.c.l.b16 %v66
  %v178 = vunpack.c.l.b16 %v67
  %v179 = vunpack.c.l.b16 %v68
  %v180 = vunpack.c.l.b16 %v69
  %v181 = vunpack.c.l.b16 %v70
  %v182 = vunpack.c.l.b16 %v71
  %v183 = vunpack.c.l.b16 %v72
  %v184 = vpack.c.b16 %v135, %v134
  %v185 = vpack.c.b16 %v137, %v136
  %v186 = vpack.c.b16 %v139, %v138
  %v187 = vpack.c.b16 %v141, %v140
  %v188 = vpack.c.b16 %v143, %v142
  %v189 = vpack.c.b16 %v145, %v144
  %v190 = vpack.c.b16 %v147, %v146
  %v191 = vpack.c.b16 %v149, %v148
  %v192 = vpack.c.b16 %v151, %v150
  %v193 = vpack.c.b16 %v153, %v152
  %v194 = vpack.c.b16 %v155, %v154
  %v195 = vpack.c.b16 %v157, %v156
  %v196 = vpack.c.b16 %v159, %v158
  %v197 = vpack.c.b16 %v161, %v160
  %v198 = vpack.c.b16 %v163, %v162
  %v199 = vpack.c.b16 %v165, %v164
  %v200 = vpack.c.b16 %v167, %v166
  %v201 = vpack.c.b16 %v169, %v168
  %v202 = vpack.c.b16 %v171, %v170
  %v203 = vpack.c.b16 %v173, %v172
  %v204 = vpack.c.b16 %v175, %v174
  %v205 = vpack.c.b16 %v177, %v176
  %v206 = vpack.c.b16 %v179, %v178
  %v207 = vpack.c.b16 %v181, %v180
  %v208 = vpack.c.b16 %v183, %v182
  %v213 = vunpack.c.l.b16 %v73
  %v214 = vunpack.c.l.b16 %v74
  %v215 = vunpack.c.l.b16 %v75
  %v216 = vunpack.c.l.b16 %v76
  %v217 = vpack.c.b16 %v214, %v213
  %v218 = vpack.c.b16 %v216, %v215
  %vm221 = vcmask 261120
  %v223 = vsel %vm221, %v184, 0
  %v226 = vsel %vm221, %v185, 0
  %v229 = vsel %vm221, %v186, 0
  %v232 = vsel %vm221, %v187, 0
  %v235 = vsel %vm221, %v188, 0
  %v238 = vsel %vm221, %v189, 0
  %v241 = vsel %vm221, %v190, 0
  %v244 = vsel %vm221, %v191, 0
  %v247 = vsel %vm221, %v192, 0
  %v250 = vsel %vm221, %v193, 0
  %v253 = vsel %vm221, %v194, 0
  %v256 = vsel %vm221, %v195, 0
  %v259 = vsel %vm221, %v196, 0
  %v262 = vsel %vm221, %v197, 0
  %v265 = vsel %vm221, %v198, 0
  %v268 = vsel %vm221, %v199, 0
  %v271 = vsel %vm221, %v200, 0
  %v274 = vsel %vm221, %v201, 0
  %v277 = vsel %vm221, %v202, 0
  %v280 = vsel %vm221, %v203, 0
  %v283 = vsel %vm221, %v204, 0
  %v286 = vsel %vm221, %v205, 0
  %v289 = vsel %vm221, %v206, 0
  %v292 = vsel %vm221, %v207, 0
  %v295 = vsel %vm221, %v208, 0
  %297 = vmatprep.subr.bf16.mxu0 0
  %298 = vmatpush1.bf16.msra.mxu0 %v217
  %299 = vmatprep.subr.bf16.mxu0 0
  %300 = vmatpush1.bf16.msra.mxu0 %v218
  %301 = vmatprep.subr.bf16.mxu0 0
  %302 = vmatpush1.bf16.msra.mxu0 0
  %303 = vmatprep.subr.bf16.mxu0 0
  %304 = vmatpush1.bf16.msra.mxu0 0
  %305 = vmatprep.subr.bf16.mxu0 0
  %306 = vmatpush1.bf16.msra.mxu0 0
  %307 = vmatprep.subr.bf16.mxu0 0
  %308 = vmatpush1.bf16.msra.mxu0 0
  %309 = vmatprep.subr.bf16.mxu0 0
  %310 = vmatpush1.bf16.msra.mxu0 0
  %311 = vmatprep.subr.bf16.mxu0 0
  %312 = vmatpush1.bf16.msra.mxu0 0
  %313 = vmatprep.subr.bf16.mxu0 0
  %314 = vmatpush1.bf16.msra.mxu0 0
  %315 = vmatprep.subr.bf16.mxu0 0
  %316 = vmatpush1.bf16.msra.mxu0 0
  %317 = vmatprep.subr.bf16.mxu0 0
  %318 = vmatpush1.bf16.msra.mxu0 0
  %319 = vmatprep.subr.bf16.mxu0 0
  %320 = vmatpush1.bf16.msra.mxu0 0
  %321 = vmatprep.subr.bf16.mxu0 0
  %322 = vmatpush1.bf16.msra.mxu0 0
  %323 = vmatprep.subr.bf16.mxu0 0
  %324 = vmatpush1.bf16.msra.mxu0 0
  %325 = vmatprep.subr.bf16.mxu0 0
  %326 = vmatpush1.bf16.msra.mxu0 0
  %327 = vmatprep.subr.bf16.mxu0 0
  %328 = vmatpush1.bf16.msra.mxu0 0
  %329 = vmatprep.mubr.bf16.mxu0 0
  %330 = vmatmul.mubr.bf16.gmra.mrb[0].mxu0 %v223
  %v331 = vpop.f32.mrb[0].mxu0
  %v332 = vadd.f32 %v82, %v331
  %v333 = vpop.f32.mrb[0].mxu0
  %v334 = vpop.f32.mrb[0].mxu0
  %v335 = vadd.f32 %v82, %v334
  %v336 = vpop.f32.mrb[0].mxu0
  %337 = vmatprep.mubr.bf16.mxu0 0
  %338 = vmatmul.mubr.bf16.gmra.mrb[0].mxu0 %v226
  %v339 = vpop.f32.mrb[0].mxu0
  %v340 = vadd.f32 %v82, %v339
  %v341 = vpop.f32.mrb[0].mxu0
  %v342 = vpop.f32.mrb[0].mxu0
  %v343 = vadd.f32 %v82, %v342
  %v344 = vpop.f32.mrb[0].mxu0
  %345 = vmatprep.mubr.bf16.mxu0 0
  %346 = vmatmul.mubr.bf16.gmra.mrb[0].mxu0 %v229
  %v347 = vpop.f32.mrb[0].mxu0
  %v348 = vadd.f32 %v82, %v347
  %v349 = vpop.f32.mrb[0].mxu0
  %v350 = vpop.f32.mrb[0].mxu0
  %v351 = vadd.f32 %v82, %v350
  %v352 = vpop.f32.mrb[0].mxu0
  %353 = vmatprep.mubr.bf16.mxu0 0
  %354 = vmatmul.mubr.bf16.gmra.mrb[0].mxu0 %v232
  %v355 = vpop.f32.mrb[0].mxu0
  %v356 = vadd.f32 %v82, %v355
  %v357 = vpop.f32.mrb[0].mxu0
  %v358 = vpop.f32.mrb[0].mxu0
  %v359 = vadd.f32 %v82, %v358
  %v360 = vpop.f32.mrb[0].mxu0
  %361 = vmatprep.mubr.bf16.mxu0 0
  %362 = vmatmul.mubr.bf16.gmra.mrb[0].mxu0 %v235
  %v363 = vpop.f32.mrb[0].mxu0
  %v364 = vadd.f32 %v82, %v363
  %v365 = vpop.f32.mrb[0].mxu0
  %v366 = vpop.f32.mrb[0].mxu0
  %v367 = vadd.f32 %v82, %v366
  %v368 = vpop.f32.mrb[0].mxu0
  %369 = vmatprep.mubr.bf16.mxu0 0
  %370 = vmatmul.mubr.bf16.gmra.mrb[0].mxu0 %v238
  %v371 = vpop.f32.mrb[0].mxu0
  %v372 = vadd.f32 %v82, %v371
  %v373 = vpop.f32.mrb[0].mxu0
  %v374 = vpop.f32.mrb[0].mxu0
  %v375 = vadd.f32 %v82, %v374
  %v376 = vpop.f32.mrb[0].mxu0
  %377 = vmatprep.mubr.bf16.mxu0 0
  %378 = vmatmul.mubr.bf16.gmra.mrb[0].mxu0 %v241
  %v379 = vpop.f32.mrb[0].mxu0
  %v380 = vadd.f32 %v82, %v379
  %v381 = vpop.f32.mrb[0].mxu0
  %v382 = vpop.f32.mrb[0].mxu0
  %v383 = vadd.f32 %v82, %v382
  %v384 = vpop.f32.mrb[0].mxu0
  %385 = vmatprep.mubr.bf16.mxu0 0
  %386 = vmatmul.mubr.bf16.gmra.mrb[0].mxu0 %v244
  %v387 = vpop.f32.mrb[0].mxu0
  %v388 = vadd.f32 %v82, %v387
  %v389 = vpop.f32.mrb[0].mxu0
  %v390 = vpop.f32.mrb[0].mxu0
  %v391 = vadd.f32 %v82, %v390
  %v392 = vpop.f32.mrb[0].mxu0
  %393 = vmatprep.mubr.bf16.mxu0 0
  %394 = vmatmul.mubr.bf16.gmra.mrb[0].mxu0 %v247
  %v395 = vpop.f32.mrb[0].mxu0
  %v396 = vadd.f32 %v82, %v395
  %v397 = vpop.f32.mrb[0].mxu0
  %v398 = vpop.f32.mrb[0].mxu0
  %v399 = vadd.f32 %v82, %v398
  %v400 = vpop.f32.mrb[0].mxu0
  %401 = vmatprep.mubr.bf16.mxu0 0
  %402 = vmatmul.mubr.bf16.gmra.mrb[0].mxu0 %v250
  %v403 = vpop.f32.mrb[0].mxu0
  %v404 = vadd.f32 %v82, %v403
  %v405 = vpop.f32.mrb[0].mxu0
  %v406 = vpop.f32.mrb[0].mxu0
  %v407 = vadd.f32 %v82, %v406
  %v408 = vpop.f32.mrb[0].mxu0
  %409 = vmatprep.mubr.bf16.mxu0 0
  %410 = vmatmul.mubr.bf16.gmra.mrb[0].mxu0 %v253
  %v411 = vpop.f32.mrb[0].mxu0
  %v412 = vadd.f32 %v82, %v411
  %v413 = vpop.f32.mrb[0].mxu0
  %v414 = vpop.f32.mrb[0].mxu0
  %v415 = vadd.f32 %v82, %v414
  %v416 = vpop.f32.mrb[0].mxu0
  %417 = vmatprep.mubr.bf16.mxu0 0
  %418 = vmatmul.mubr.bf16.gmra.mrb[0].mxu0 %v256
  %v419 = vpop.f32.mrb[0].mxu0
  %v420 = vadd.f32 %v82, %v419
  %v421 = vpop.f32.mrb[0].mxu0
  %v422 = vpop.f32.mrb[0].mxu0
  %v423 = vadd.f32 %v82, %v422
  %v424 = vpop.f32.mrb[0].mxu0
  %425 = vmatprep.mubr.bf16.mxu0 0
  %426 = vmatmul.mubr.bf16.gmra.mrb[0].mxu0 %v259
  %v427 = vpop.f32.mrb[0].mxu0
  %v428 = vadd.f32 %v82, %v427
  %v429 = vpop.f32.mrb[0].mxu0
  %v430 = vpop.f32.mrb[0].mxu0
  %v431 = vadd.f32 %v82, %v430
  %v432 = vpop.f32.mrb[0].mxu0
  %433 = vmatprep.mubr.bf16.mxu0 0
  %434 = vmatmul.mubr.bf16.gmra.mrb[0].mxu0 %v262
  %v435 = vpop.f32.mrb[0].mxu0
  %v436 = vadd.f32 %v82, %v435
  %v437 = vpop.f32.mrb[0].mxu0
  %v438 = vpop.f32.mrb[0].mxu0
  %v439 = vadd.f32 %v82, %v438
  %v440 = vpop.f32.mrb[0].mxu0
  %441 = vmatprep.mubr.bf16.mxu0 0
  %442 = vmatmul.mubr.bf16.gmra.mrb[0].mxu0 %v265
  %v443 = vpop.f32.mrb[0].mxu0
  %v444 = vadd.f32 %v82, %v443
  %v445 = vpop.f32.mrb[0].mxu0
  %v446 = vpop.f32.mrb[0].mxu0
  %v447 = vadd.f32 %v82, %v446
  %v448 = vpop.f32.mrb[0].mxu0
  %449 = vmatprep.mubr.bf16.mxu0 0
  %450 = vmatmul.mubr.bf16.gmra.mrb[0].mxu0 %v268
  %v451 = vpop.f32.mrb[0].mxu0
  %v452 = vadd.f32 %v82, %v451
  %v453 = vpop.f32.mrb[0].mxu0
  %v454 = vpop.f32.mrb[0].mxu0
  %v455 = vadd.f32 %v82, %v454
  %v456 = vpop.f32.mrb[0].mxu0
  %457 = vmatprep.mubr.bf16.mxu0 0
  %458 = vmatmul.mubr.bf16.gmra.mrb[0].mxu0 %v271
  %v459 = vpop.f32.mrb[0].mxu0
  %v460 = vadd.f32 %v82, %v459
  %v461 = vpop.f32.mrb[0].mxu0
  %v462 = vpop.f32.mrb[0].mxu0
  %v463 = vadd.f32 %v82, %v462
  %v464 = vpop.f32.mrb[0].mxu0
  %465 = vmatprep.mubr.bf16.mxu0 0
  %466 = vmatmul.mubr.bf16.gmra.mrb[0].mxu0 %v274
  %v467 = vpop.f32.mrb[0].mxu0
  %v468 = vadd.f32 %v82, %v467
  %v469 = vpop.f32.mrb[0].mxu0
  %v470 = vpop.f32.mrb[0].mxu0
  %v471 = vadd.f32 %v82, %v470
  %v472 = vpop.f32.mrb[0].mxu0
  %473 = vmatprep.mubr.bf16.mxu0 0
  %474 = vmatmul.mubr.bf16.gmra.mrb[0].mxu0 %v277
  %v475 = vpop.f32.mrb[0].mxu0
  %v476 = vadd.f32 %v82, %v475
  %v477 = vpop.f32.mrb[0].mxu0
  %v478 = vpop.f32.mrb[0].mxu0
  %v479 = vadd.f32 %v82, %v478
  %v480 = vpop.f32.mrb[0].mxu0
  %481 = vmatprep.mubr.bf16.mxu0 0
  %482 = vmatmul.mubr.bf16.gmra.mrb[0].mxu0 %v280
  %v483 = vpop.f32.mrb[0].mxu0
  %v484 = vadd.f32 %v82, %v483
  %v485 = vpop.f32.mrb[0].mxu0
  %v486 = vpop.f32.mrb[0].mxu0
  %v487 = vadd.f32 %v82, %v486
  %v488 = vpop.f32.mrb[0].mxu0
  %489 = vmatprep.mubr.bf16.mxu0 0
  %490 = vmatmul.mubr.bf16.gmra.mrb[0].mxu0 %v283
  %v491 = vpop.f32.mrb[0].mxu0
  %v492 = vadd.f32 %v82, %v491
  %v493 = vpop.f32.mrb[0].mxu0
  %v494 = vpop.f32.mrb[0].mxu0
  %v495 = vadd.f32 %v82, %v494
  %v496 = vpop.f32.mrb[0].mxu0
  %497 = vmatprep.mubr.bf16.mxu0 0
  %498 = vmatmul.mubr.bf16.gmra.mrb[0].mxu0 %v286
  %v499 = vpop.f32.mrb[0].mxu0
  %v500 = vadd.f32 %v82, %v499
  %v501 = vpop.f32.mrb[0].mxu0
  %v502 = vpop.f32.mrb[0].mxu0
  %v503 = vadd.f32 %v82, %v502
  %v504 = vpop.f32.mrb[0].mxu0
  %505 = vmatprep.mubr.bf16.mxu0 0
  %506 = vmatmul.mubr.bf16.gmra.mrb[0].mxu0 %v289
  %v507 = vpop.f32.mrb[0].mxu0
  %v508 = vadd.f32 %v82, %v507
  %v509 = vpop.f32.mrb[0].mxu0
  %v510 = vpop.f32.mrb[0].mxu0
  %v511 = vadd.f32 %v82, %v510
  %v512 = vpop.f32.mrb[0].mxu0
  %513 = vmatprep.mubr.bf16.mxu0 0
  %514 = vmatmul.mubr.bf16.gmra.mrb[0].mxu0 %v292
  %v515 = vpop.f32.mrb[0].mxu0
  %v516 = vadd.f32 %v82, %v515
  %v517 = vpop.f32.mrb[0].mxu0
  %v518 = vpop.f32.mrb[0].mxu0
  %v519 = vadd.f32 %v82, %v518
  %v520 = vpop.f32.mrb[0].mxu0
  %521 = vmatprep.mubr.bf16.mxu0 0
  %522 = vmatmul.mubr.bf16.gmra.mrb[0].mxu0 %v295
  %v523 = vpop.f32.mrb[0].mxu0
  %v524 = vadd.f32 %v82, %v523
  %v525 = vpop.f32.mrb[0].mxu0
  %v526 = vpop.f32.mrb[0].mxu0
  %v527 = vadd.f32 %v82, %v526
  %v528 = vpop.f32.mrb[0].mxu0
  %529 = vdwg.mxu0
  %vm530 = vcmp.gt.f32.partialorder %v332, 0.0
  %vm531 = vcmp.gt.f32.partialorder %v335, 0.0
  %vm532 = vcmp.gt.f32.partialorder %v340, 0.0
  %vm533 = vcmp.gt.f32.partialorder %v343, 0.0
  %vm534 = vcmp.gt.f32.partialorder %v348, 0.0
  %vm535 = vcmp.gt.f32.partialorder %v351, 0.0
  %vm536 = vcmp.gt.f32.partialorder %v356, 0.0
  %vm537 = vcmp.gt.f32.partialorder %v359, 0.0
  %vm538 = vcmp.gt.f32.partialorder %v364, 0.0
  %vm539 = vcmp.gt.f32.partialorder %v367, 0.0
  %vm540 = vcmp.gt.f32.partialorder %v372, 0.0
  %vm541 = vcmp.gt.f32.partialorder %v375, 0.0
  %vm542 = vcmp.gt.f32.partialorder %v380, 0.0
  %vm543 = vcmp.gt.f32.partialorder %v383, 0.0
  %vm544 = vcmp.gt.f32.partialorder %v388, 0.0
  %vm545 = vcmp.gt.f32.partialorder %v391, 0.0
  %vm546 = vcmp.gt.f32.partialorder %v396, 0.0
  %vm547 = vcmp.gt.f32.partialorder %v399, 0.0
  %vm548 = vcmp.gt.f32.partialorder %v404, 0.0
  %vm549 = vcmp.gt.f32.partialorder %v407, 0.0
  %vm550 = vcmp.gt.f32.partialorder %v412, 0.0
  %vm551 = vcmp.gt.f32.partialorder %v415, 0.0
  %vm552 = vcmp.gt.f32.partialorder %v420, 0.0
  %vm553 = vcmp.gt.f32.partialorder %v423, 0.0
  %vm554 = vcmp.gt.f32.partialorder %v428, 0.0
  %vm555 = vcmp.gt.f32.partialorder %v431, 0.0
  %vm556 = vcmp.gt.f32.partialorder %v436, 0.0
  %vm557 = vcmp.gt.f32.partialorder %v439, 0.0
  %vm558 = vcmp.gt.f32.partialorder %v444, 0.0
  %vm559 = vcmp.gt.f32.partialorder %v447, 0.0
  %vm560 = vcmp.gt.f32.partialorder %v452, 0.0
  %vm561 = vcmp.gt.f32.partialorder %v455, 0.0
  %vm562 = vcmp.gt.f32.partialorder %v460, 0.0
  %vm563 = vcmp.gt.f32.partialorder %v463, 0.0
  %vm564 = vcmp.gt.f32.partialorder %v468, 0.0
  %vm565 = vcmp.gt.f32.partialorder %v471, 0.0
  %vm566 = vcmp.gt.f32.partialorder %v476, 0.0
  %vm567 = vcmp.gt.f32.partialorder %v479, 0.0
  %vm568 = vcmp.gt.f32.partialorder %v484, 0.0
  %vm569 = vcmp.gt.f32.partialorder %v487, 0.0
  %vm570 = vcmp.gt.f32.partialorder %v492, 0.0
  %vm571 = vcmp.gt.f32.partialorder %v495, 0.0
  %vm572 = vcmp.gt.f32.partialorder %v500, 0.0
  %vm573 = vcmp.gt.f32.partialorder %v503, 0.0
  %vm574 = vcmp.gt.f32.partialorder %v508, 0.0
  %vm575 = vcmp.gt.f32.partialorder %v511, 0.0
  %vm576 = vcmp.gt.f32.partialorder %v516, 0.0
  %vm577 = vcmp.gt.f32.partialorder %v519, 0.0
  %vm578 = vcmp.gt.f32.partialorder %v524, 0.0
  %vm579 = vcmp.gt.f32.partialorder %v527, 0.0
  %v580 = vmul.f32 %v332, 0.01
  %v581 = vmul.f32 %v335, 0.01
  %v582 = vmul.f32 %v340, 0.01
  %v583 = vmul.f32 %v343, 0.01
  %v584 = vmul.f32 %v348, 0.01
  %v585 = vmul.f32 %v351, 0.01
  %v586 = vmul.f32 %v356, 0.01
  %v587 = vmul.f32 %v359, 0.01
  %v588 = vmul.f32 %v364, 0.01
  %v589 = vmul.f32 %v367, 0.01
  %v590 = vmul.f32 %v372, 0.01
  %v591 = vmul.f32 %v375, 0.01
  %v592 = vmul.f32 %v380, 0.01
  %v593 = vmul.f32 %v383, 0.01
  %v594 = vmul.f32 %v388, 0.01
  %v595 = vmul.f32 %v391, 0.01
  %v596 = vmul.f32 %v396, 0.01
  %v597 = vmul.f32 %v399, 0.01
  %v598 = vmul.f32 %v404, 0.01
  %v599 = vmul.f32 %v407, 0.01
  %v600 = vmul.f32 %v412, 0.01
  %v601 = vmul.f32 %v415, 0.01
  %v602 = vmul.f32 %v420, 0.01
  %v603 = vmul.f32 %v423, 0.01
  %v604 = vmul.f32 %v428, 0.01
  %v605 = vmul.f32 %v431, 0.01
  %v606 = vmul.f32 %v436, 0.01
  %v607 = vmul.f32 %v439, 0.01
  %v608 = vmul.f32 %v444, 0.01
  %v609 = vmul.f32 %v447, 0.01
  %v610 = vmul.f32 %v452, 0.01
  %v611 = vmul.f32 %v455, 0.01
  %v612 = vmul.f32 %v460, 0.01
  %v613 = vmul.f32 %v463, 0.01
  %v614 = vmul.f32 %v468, 0.01
  %v615 = vmul.f32 %v471, 0.01
  %v616 = vmul.f32 %v476, 0.01
  %v617 = vmul.f32 %v479, 0.01
  %v618 = vmul.f32 %v484, 0.01
  %v619 = vmul.f32 %v487, 0.01
  %v620 = vmul.f32 %v492, 0.01
  %v621 = vmul.f32 %v495, 0.01
  %v622 = vmul.f32 %v500, 0.01
  %v623 = vmul.f32 %v503, 0.01
  %v624 = vmul.f32 %v508, 0.01
  %v625 = vmul.f32 %v511, 0.01
  %v626 = vmul.f32 %v516, 0.01
  %v627 = vmul.f32 %v519, 0.01
  %v628 = vmul.f32 %v524, 0.01
  %v629 = vmul.f32 %v527, 0.01
  %v630 = vsel %vm530, %v332, %v580
  %v631 = vsel %vm531, %v335, %v581
  %v632 = vsel %vm532, %v340, %v582
  %v633 = vsel %vm533, %v343, %v583
  %v634 = vsel %vm534, %v348, %v584
  %v635 = vsel %vm535, %v351, %v585
  %v636 = vsel %vm536, %v356, %v586
  %v637 = vsel %vm537, %v359, %v587
  %v638 = vsel %vm538, %v364, %v588
  %v639 = vsel %vm539, %v367, %v589
  %v640 = vsel %vm540, %v372, %v590
  %v641 = vsel %vm541, %v375, %v591
  %v642 = vsel %vm542, %v380, %v592
  %v643 = vsel %vm543, %v383, %v593
  %v644 = vsel %vm544, %v388, %v594
  %v645 = vsel %vm545, %v391, %v595
  %v646 = vsel %vm546, %v396, %v596
  %v647 = vsel %vm547, %v399, %v597
  %v648 = vsel %vm548, %v404, %v598
  %v649 = vsel %vm549, %v407, %v599
  %v650 = vsel %vm550, %v412, %v600
  %v651 = vsel %vm551, %v415, %v601
  %v652 = vsel %vm552, %v420, %v602
  %v653 = vsel %vm553, %v423, %v603
  %v654 = vsel %vm554, %v428, %v604
  %v655 = vsel %vm555, %v431, %v605
  %v656 = vsel %vm556, %v436, %v606
  %v657 = vsel %vm557, %v439, %v607
  %v658 = vsel %vm558, %v444, %v608
  %v659 = vsel %vm559, %v447, %v609
  %v660 = vsel %vm560, %v452, %v610
  %v661 = vsel %vm561, %v455, %v611
  %v662 = vsel %vm562, %v460, %v612
  %v663 = vsel %vm563, %v463, %v613
  %v664 = vsel %vm564, %v468, %v614
  %v665 = vsel %vm565, %v471, %v615
  %v666 = vsel %vm566, %v476, %v616
  %v667 = vsel %vm567, %v479, %v617
  %v668 = vsel %vm568, %v484, %v618
  %v669 = vsel %vm569, %v487, %v619
  %v670 = vsel %vm570, %v492, %v620
  %v671 = vsel %vm571, %v495, %v621
  %v672 = vsel %vm572, %v500, %v622
  %v673 = vsel %vm573, %v503, %v623
  %v674 = vsel %vm574, %v508, %v624
  %v675 = vsel %vm575, %v511, %v625
  %v676 = vsel %vm576, %v516, %v626
  %v677 = vsel %vm577, %v519, %v627
  %v678 = vsel %vm578, %v524, %v628
  %v679 = vsel %vm579, %v527, %v629
  %v680 = vld [vmem:[%s3] sm:$0x1]
  %v682 = vlaneseq
  %v683 = vshrl.u32 %v682, 7
  %v684 = vsub.s32 0, %v683
  %v685 = vrot.slane %v680, %v684
  %v687 = vmul.f32 %v630, %v685
  %v688 = vmul.f32 %v631, %v685
  %v689 = vmul.f32 %v632, %v685
  %v690 = vmul.f32 %v633, %v685
  %v691 = vmul.f32 %v634, %v685
  %v692 = vmul.f32 %v635, %v685
  %v693 = vmul.f32 %v636, %v685
  %v694 = vmul.f32 %v637, %v685
  %v695 = vmul.f32 %v638, %v685
  %v696 = vmul.f32 %v639, %v685
  %v697 = vmul.f32 %v640, %v685
  %v698 = vmul.f32 %v641, %v685
  %v699 = vmul.f32 %v642, %v685
  %v700 = vmul.f32 %v643, %v685
  %v701 = vmul.f32 %v644, %v685
  %v702 = vmul.f32 %v645, %v685
  %v703 = vmul.f32 %v646, %v685
  %v704 = vmul.f32 %v647, %v685
  %v705 = vmul.f32 %v648, %v685
  %v706 = vmul.f32 %v649, %v685
  %v707 = vmul.f32 %v650, %v685
  %v708 = vmul.f32 %v651, %v685
  %v709 = vmul.f32 %v652, %v685
  %v710 = vmul.f32 %v653, %v685
  %v711 = vmul.f32 %v654, %v685
  %v712 = vmul.f32 %v655, %v685
  %v713 = vmul.f32 %v656, %v685
  %v714 = vmul.f32 %v657, %v685
  %v715 = vmul.f32 %v658, %v685
  %v716 = vmul.f32 %v659, %v685
  %v717 = vmul.f32 %v660, %v685
  %v718 = vmul.f32 %v661, %v685
  %v719 = vmul.f32 %v662, %v685
  %v720 = vmul.f32 %v663, %v685
  %v721 = vmul.f32 %v664, %v685
  %v722 = vmul.f32 %v665, %v685
  %v723 = vmul.f32 %v666, %v685
  %v724 = vmul.f32 %v667, %v685
  %v725 = vmul.f32 %v668, %v685
  %v726 = vmul.f32 %v669, %v685
  %v727 = vmul.f32 %v670, %v685
  %v728 = vmul.f32 %v671, %v685
  %v729 = vmul.f32 %v672, %v685
  %v730 = vmul.f32 %v673, %v685
  %v731 = vmul.f32 %v674, %v685
  %v732 = vmul.f32 %v675, %v685
  %v733 = vmul.f32 %v676, %v685
  %v734 = vmul.f32 %v677, %v685
  %v735 = vmul.f32 %v678, %v685
  %v736 = vmul.f32 %v679, %v685
  %v737 = vsel %vm221, %v687, 0.0
  %738 = vadd.xlane.f32.xlu0 %v737
  %v739 = vpop.xlane.xlu0 %738
  %v740 = vsel %vm221, %v688, 0.0
  %741 = vadd.xlane.f32.xlu0 %v740
  %v742 = vpop.xlane.xlu0 %741
  %v743 = vsel %vm221, %v689, 0.0
  %744 = vadd.xlane.f32.xlu0 %v743
  %v745 = vpop.xlane.xlu0 %744
  %v746 = vsel %vm221, %v690, 0.0
  %747 = vadd.xlane.f32.xlu0 %v746
  %v748 = vpop.xlane.xlu0 %747
  %v749 = vsel %vm221, %v691, 0.0
  %750 = vadd.xlane.f32.xlu0 %v749
  %v751 = vpop.xlane.xlu0 %750
  %v752 = vsel %vm221, %v692, 0.0
  %753 = vadd.xlane.f32.xlu0 %v752
  %v754 = vpop.xlane.xlu0 %753
  %v755 = vsel %vm221, %v693, 0.0
  %756 = vadd.xlane.f32.xlu0 %v755
  %v757 = vpop.xlane.xlu0 %756
  %v758 = vsel %vm221, %v694, 0.0
  %759 = vadd.xlane.f32.xlu0 %v758
  %v760 = vpop.xlane.xlu0 %759
  %v761 = vsel %vm221, %v695, 0.0
  %762 = vadd.xlane.f32.xlu0 %v761
  %v763 = vpop.xlane.xlu0 %762
  %v764 = vsel %vm221, %v696, 0.0
  %765 = vadd.xlane.f32.xlu0 %v764
  %v766 = vpop.xlane.xlu0 %765
  %v767 = vsel %vm221, %v697, 0.0
  %768 = vadd.xlane.f32.xlu0 %v767
  %v769 = vpop.xlane.xlu0 %768
  %v770 = vsel %vm221, %v698, 0.0
  %771 = vadd.xlane.f32.xlu0 %v770
  %v772 = vpop.xlane.xlu0 %771
  %v773 = vsel %vm221, %v699, 0.0
  %774 = vadd.xlane.f32.xlu0 %v773
  %v775 = vpop.xlane.xlu0 %774
  %v776 = vsel %vm221, %v700, 0.0
  %777 = vadd.xlane.f32.xlu0 %v776
  %v778 = vpop.xlane.xlu0 %777
  %v779 = vsel %vm221, %v701, 0.0
  %780 = vadd.xlane.f32.xlu0 %v779
  %v781 = vpop.xlane.xlu0 %780
  %v782 = vsel %vm221, %v702, 0.0
  %783 = vadd.xlane.f32.xlu0 %v782
  %v784 = vpop.xlane.xlu0 %783
  %v785 = vsel %vm221, %v703, 0.0
  %786 = vadd.xlane.f32.xlu0 %v785
  %v787 = vpop.xlane.xlu0 %786
  %v788 = vsel %vm221, %v704, 0.0
  %789 = vadd.xlane.f32.xlu0 %v788
  %v790 = vpop.xlane.xlu0 %789
  %v791 = vsel %vm221, %v705, 0.0
  %792 = vadd.xlane.f32.xlu0 %v791
  %v793 = vpop.xlane.xlu0 %792
  %v794 = vsel %vm221, %v706, 0.0
  %795 = vadd.xlane.f32.xlu0 %v794
  %v796 = vpop.xlane.xlu0 %795
  %v797 = vsel %vm221, %v707, 0.0
  %798 = vadd.xlane.f32.xlu0 %v797
  %v799 = vpop.xlane.xlu0 %798
  %v800 = vsel %vm221, %v708, 0.0
  %801 = vadd.xlane.f32.xlu0 %v800
  %v802 = vpop.xlane.xlu0 %801
  %v803 = vsel %vm221, %v709, 0.0
  %804 = vadd.xlane.f32.xlu0 %v803
  %v805 = vpop.xlane.xlu0 %804
  %v806 = vsel %vm221, %v710, 0.0
  %807 = vadd.xlane.f32.xlu0 %v806
  %v808 = vpop.xlane.xlu0 %807
  %v809 = vsel %vm221, %v711, 0.0
  %810 = vadd.xlane.f32.xlu0 %v809
  %v811 = vpop.xlane.xlu0 %810
  %v812 = vsel %vm221, %v712, 0.0
  %813 = vadd.xlane.f32.xlu0 %v812
  %v814 = vpop.xlane.xlu0 %813
  %v815 = vsel %vm221, %v713, 0.0
  %816 = vadd.xlane.f32.xlu0 %v815
  %v817 = vpop.xlane.xlu0 %816
  %v818 = vsel %vm221, %v714, 0.0
  %819 = vadd.xlane.f32.xlu0 %v818
  %v820 = vpop.xlane.xlu0 %819
  %v821 = vsel %vm221, %v715, 0.0
  %822 = vadd.xlane.f32.xlu0 %v821
  %v823 = vpop.xlane.xlu0 %822
  %v824 = vsel %vm221, %v716, 0.0
  %825 = vadd.xlane.f32.xlu0 %v824
  %v826 = vpop.xlane.xlu0 %825
  %v827 = vsel %vm221, %v717, 0.0
  %828 = vadd.xlane.f32.xlu0 %v827
  %v829 = vpop.xlane.xlu0 %828
  %v830 = vsel %vm221, %v718, 0.0
  %831 = vadd.xlane.f32.xlu0 %v830
  %v832 = vpop.xlane.xlu0 %831
  %v833 = vsel %vm221, %v719, 0.0
  %834 = vadd.xlane.f32.xlu0 %v833
  %v835 = vpop.xlane.xlu0 %834
  %v836 = vsel %vm221, %v720, 0.0
  %837 = vadd.xlane.f32.xlu0 %v836
  %v838 = vpop.xlane.xlu0 %837
  %v839 = vsel %vm221, %v721, 0.0
  %840 = vadd.xlane.f32.xlu0 %v839
  %v841 = vpop.xlane.xlu0 %840
  %v842 = vsel %vm221, %v722, 0.0
  %843 = vadd.xlane.f32.xlu0 %v842
  %v844 = vpop.xlane.xlu0 %843
  %v845 = vsel %vm221, %v723, 0.0
  %846 = vadd.xlane.f32.xlu0 %v845
  %v847 = vpop.xlane.xlu0 %846
  %v848 = vsel %vm221, %v724, 0.0
  %849 = vadd.xlane.f32.xlu0 %v848
  %v850 = vpop.xlane.xlu0 %849
  %v851 = vsel %vm221, %v725, 0.0
  %852 = vadd.xlane.f32.xlu0 %v851
  %v853 = vpop.xlane.xlu0 %852
  %v854 = vsel %vm221, %v726, 0.0
  %855 = vadd.xlane.f32.xlu0 %v854
  %v856 = vpop.xlane.xlu0 %855
  %v857 = vsel %vm221, %v727, 0.0
  %858 = vadd.xlane.f32.xlu0 %v857
  %v859 = vpop.xlane.xlu0 %858
  %v860 = vsel %vm221, %v728, 0.0
  %861 = vadd.xlane.f32.xlu0 %v860
  %v862 = vpop.xlane.xlu0 %861
  %v863 = vsel %vm221, %v729, 0.0
  %864 = vadd.xlane.f32.xlu0 %v863
  %v865 = vpop.xlane.xlu0 %864
  %v866 = vsel %vm221, %v730, 0.0
  %867 = vadd.xlane.f32.xlu0 %v866
  %v868 = vpop.xlane.xlu0 %867
  %v869 = vsel %vm221, %v731, 0.0
  %870 = vadd.xlane.f32.xlu0 %v869
  %v871 = vpop.xlane.xlu0 %870
  %v872 = vsel %vm221, %v732, 0.0
  %873 = vadd.xlane.f32.xlu0 %v872
  %v874 = vpop.xlane.xlu0 %873
  %v875 = vsel %vm221, %v733, 0.0
  %876 = vadd.xlane.f32.xlu0 %v875
  %v877 = vpop.xlane.xlu0 %876
  %v878 = vsel %vm221, %v734, 0.0
  %879 = vadd.xlane.f32.xlu0 %v878
  %v880 = vpop.xlane.xlu0 %879
  %v881 = vsel %vm221, %v735, 0.0
  %882 = vadd.xlane.f32.xlu0 %v881
  %v883 = vpop.xlane.xlu0 %882
  %v884 = vsel %vm221, %v736, 0.0
  %885 = vadd.xlane.f32.xlu0 %v884
  %v886 = vpop.xlane.xlu0 %885
  %v887 = vld [vmem:[#allocation2] sm:$0x1]
  %v889 = vlaneseq
  %v890 = vshrl.u32 %v889, 7
  %v891 = vsub.s32 0, %v890
  %v892 = vrot.slane %v887, %v891
  %v894 = vadd.f32 %v739, %v892
  %v895 = vadd.f32 %v742, %v892
  %v896 = vadd.f32 %v745, %v892
  %v897 = vadd.f32 %v748, %v892
  %v898 = vadd.f32 %v751, %v892
  %v899 = vadd.f32 %v754, %v892
  %v900 = vadd.f32 %v757, %v892
  %v901 = vadd.f32 %v760, %v892
  %v902 = vadd.f32 %v763, %v892
  %v903 = vadd.f32 %v766, %v892
  %v904 = vadd.f32 %v769, %v892
  %v905 = vadd.f32 %v772, %v892
  %v906 = vadd.f32 %v775, %v892
  %v907 = vadd.f32 %v778, %v892
  %v908 = vadd.f32 %v781, %v892
  %v909 = vadd.f32 %v784, %v892
  %v910 = vadd.f32 %v787, %v892
  %v911 = vadd.f32 %v790, %v892
  %v912 = vadd.f32 %v793, %v892
  %v913 = vadd.f32 %v796, %v892
  %v914 = vadd.f32 %v799, %v892
  %v915 = vadd.f32 %v802, %v892
  %v916 = vadd.f32 %v805, %v892
  %v917 = vadd.f32 %v808, %v892
  %v918 = vadd.f32 %v811, %v892
  %v919 = vadd.f32 %v814, %v892
  %v920 = vadd.f32 %v817, %v892
  %v921 = vadd.f32 %v820, %v892
  %v922 = vadd.f32 %v823, %v892
  %v923 = vadd.f32 %v826, %v892
  %v924 = vadd.f32 %v829, %v892
  %v925 = vadd.f32 %v832, %v892
  %v926 = vadd.f32 %v835, %v892
  %v927 = vadd.f32 %v838, %v892
  %v928 = vadd.f32 %v841, %v892
  %v929 = vadd.f32 %v844, %v892
  %v930 = vadd.f32 %v847, %v892
  %v931 = vadd.f32 %v850, %v892
  %v932 = vadd.f32 %v853, %v892
  %v933 = vadd.f32 %v856, %v892
  %v934 = vadd.f32 %v859, %v892
  %v935 = vadd.f32 %v862, %v892
  %v936 = vadd.f32 %v865, %v892
  %v937 = vadd.f32 %v868, %v892
  %v938 = vadd.f32 %v871, %v892
  %v939 = vadd.f32 %v874, %v892
  %v940 = vadd.f32 %v877, %v892
  %v941 = vadd.f32 %v880, %v892
  %v942 = vadd.f32 %v883, %v892
  %v943 = vadd.f32 %v886, %v892
  %v944 = vxor.u32 %v894, 2147483648
  %v945 = vxor.u32 %v895, 2147483648
  %v946 = vxor.u32 %v896, 2147483648
  %v947 = vxor.u32 %v897, 2147483648
  %v948 = vxor.u32 %v898, 2147483648
  %v949 = vxor.u32 %v899, 2147483648
  %v950 = vxor.u32 %v900, 2147483648
  %v951 = vxor.u32 %v901, 2147483648
  %v952 = vxor.u32 %v902, 2147483648
  %v953 = vxor.u32 %v903, 2147483648
  %v954 = vxor.u32 %v904, 2147483648
  %v955 = vxor.u32 %v905, 2147483648
  %v956 = vxor.u32 %v906, 2147483648
  %v957 = vxor.u32 %v907, 2147483648
  %v958 = vxor.u32 %v908, 2147483648
  %v959 = vxor.u32 %v909, 2147483648
  %v960 = vxor.u32 %v910, 2147483648
  %v961 = vxor.u32 %v911, 2147483648
  %v962 = vxor.u32 %v912, 2147483648
  %v963 = vxor.u32 %v913, 2147483648
  %v964 = vxor.u32 %v914, 2147483648
  %v965 = vxor.u32 %v915, 2147483648
  %v966 = vxor.u32 %v916, 2147483648
  %v967 = vxor.u32 %v917, 2147483648
  %v968 = vxor.u32 %v918, 2147483648
  %v969 = vxor.u32 %v919, 2147483648
  %v970 = vxor.u32 %v920, 2147483648
  %v971 = vxor.u32 %v921, 2147483648
  %v972 = vxor.u32 %v922, 2147483648
  %v973 = vxor.u32 %v923, 2147483648
  %v974 = vxor.u32 %v924, 2147483648
  %v975 = vxor.u32 %v925, 2147483648
  %v976 = vxor.u32 %v926, 2147483648
  %v977 = vxor.u32 %v927, 2147483648
  %v978 = vxor.u32 %v928, 2147483648
  %v979 = vxor.u32 %v929, 2147483648
  %v980 = vxor.u32 %v930, 2147483648
  %v981 = vxor.u32 %v931, 2147483648
  %v982 = vxor.u32 %v932, 2147483648
  %v983 = vxor.u32 %v933, 2147483648
  %v984 = vxor.u32 %v934, 2147483648
  %v985 = vxor.u32 %v935, 2147483648
  %v986 = vxor.u32 %v936, 2147483648
  %v987 = vxor.u32 %v937, 2147483648
  %v988 = vxor.u32 %v938, 2147483648
  %v989 = vxor.u32 %v939, 2147483648
  %v990 = vxor.u32 %v940, 2147483648
  %v991 = vxor.u32 %v941, 2147483648
  %v992 = vxor.u32 %v942, 2147483648
  %v993 = vxor.u32 %v943, 2147483648
  %v994 = vmul.f32 %v944, 1.442695
  %v995 = vpow.pop %v994
  %v996 = vmul.f32 %v945, 1.442695
  %v997 = vpow.pop %v996
  %v998 = vmul.f32 %v946, 1.442695
  %v999 = vpow.pop %v998
  %v1000 = vmul.f32 %v947, 1.442695
  %v1001 = vpow.pop %v1000
  %v1002 = vmul.f32 %v948, 1.442695
  %v1003 = vpow.pop %v1002
  %v1004 = vmul.f32 %v949, 1.442695
  %v1005 = vpow.pop %v1004
  %v1006 = vmul.f32 %v950, 1.442695
  %v1007 = vpow.pop %v1006
  %v1008 = vmul.f32 %v951, 1.442695
  %v1009 = vpow.pop %v1008
  %v1010 = vmul.f32 %v952, 1.442695
  %v1011 = vpow.pop %v1010
  %v1012 = vmul.f32 %v953, 1.442695
  %v1013 = vpow.pop %v1012
  %v1014 = vmul.f32 %v954, 1.442695
  %v1015 = vpow.pop %v1014
  %v1016 = vmul.f32 %v955, 1.442695
  %v1017 = vpow.pop %v1016
  %v1018 = vmul.f32 %v956, 1.442695
  %v1019 = vpow.pop %v1018
  %v1020 = vmul.f32 %v957, 1.442695
  %v1021 = vpow.pop %v1020
  %v1022 = vmul.f32 %v958, 1.442695
  %v1023 = vpow.pop %v1022
  %v1024 = vmul.f32 %v959, 1.442695
  %v1025 = vpow.pop %v1024
  %v1026 = vmul.f32 %v960, 1.442695
  %v1027 = vpow.pop %v1026
  %v1028 = vmul.f32 %v961, 1.442695
  %v1029 = vpow.pop %v1028
  %v1030 = vmul.f32 %v962, 1.442695
  %v1031 = vpow.pop %v1030
  %v1032 = vmul.f32 %v963, 1.442695
  %v1033 = vpow.pop %v1032
  %v1034 = vmul.f32 %v964, 1.442695
  %v1035 = vpow.pop %v1034
  %v1036 = vmul.f32 %v965, 1.442695
  %v1037 = vpow.pop %v1036
  %v1038 = vmul.f32 %v966, 1.442695
  %v1039 = vpow.pop %v1038
  %v1040 = vmul.f32 %v967, 1.442695
  %v1041 = vpow.pop %v1040
  %v1042 = vmul.f32 %v968, 1.442695
  %v1043 = vpow.pop %v1042
  %v1044 = vmul.f32 %v969, 1.442695
  %v1045 = vpow.pop %v1044
  %v1046 = vmul.f32 %v970, 1.442695
  %v1047 = vpow.pop %v1046
  %v1048 = vmul.f32 %v971, 1.442695
  %v1049 = vpow.pop %v1048
  %v1050 = vmul.f32 %v972, 1.442695
  %v1051 = vpow.pop %v1050
  %v1052 = vmul.f32 %v973, 1.442695
  %v1053 = vpow.pop %v1052
  %v1054 = vmul.f32 %v974, 1.442695
  %v1055 = vpow.pop %v1054
  %v1056 = vmul.f32 %v975, 1.442695
  %v1057 = vpow.pop %v1056
  %v1058 = vmul.f32 %v976, 1.442695
  %v1059 = vpow.pop %v1058
  %v1060 = vmul.f32 %v977, 1.442695
  %v1061 = vpow.pop %v1060
  %v1062 = vmul.f32 %v978, 1.442695
  %v1063 = vpow.pop %v1062
  %v1064 = vmul.f32 %v979, 1.442695
  %v1065 = vpow.pop %v1064
  %v1066 = vmul.f32 %v980, 1.442695
  %v1067 = vpow.pop %v1066
  %v1068 = vmul.f32 %v981, 1.442695
  %v1069 = vpow.pop %v1068
  %v1070 = vmul.f32 %v982, 1.442695
  %v1071 = vpow.pop %v1070
  %v1072 = vmul.f32 %v983, 1.442695
  %v1073 = vpow.pop %v1072
  %v1074 = vmul.f32 %v984, 1.442695
  %v1075 = vpow.pop %v1074
  %v1076 = vmul.f32 %v985, 1.442695
  %v1077 = vpow.pop %v1076
  %v1078 = vmul.f32 %v986, 1.442695
  %v1079 = vpow.pop %v1078
  %v1080 = vmul.f32 %v987, 1.442695
  %v1081 = vpow.pop %v1080
  %v1082 = vmul.f32 %v988, 1.442695
  %v1083 = vpow.pop %v1082
  %v1084 = vmul.f32 %v989, 1.442695
  %v1085 = vpow.pop %v1084
  %v1086 = vmul.f32 %v990, 1.442695
  %v1087 = vpow.pop %v1086
  %v1088 = vmul.f32 %v991, 1.442695
  %v1089 = vpow.pop %v1088
  %v1090 = vmul.f32 %v992, 1.442695
  %v1091 = vpow.pop %v1090
  %v1092 = vmul.f32 %v993, 1.442695
  %v1093 = vpow.pop %v1092
  %v1094 = vadd.f32 %v995, 1.0
  %v1095 = vadd.f32 %v997, 1.0
  %v1096 = vadd.f32 %v999, 1.0
  %v1097 = vadd.f32 %v1001, 1.0
  %v1098 = vadd.f32 %v1003, 1.0
  %v1099 = vadd.f32 %v1005, 1.0
  %v1100 = vadd.f32 %v1007, 1.0
  %v1101 = vadd.f32 %v1009, 1.0
  %v1102 = vadd.f32 %v1011, 1.0
  %v1103 = vadd.f32 %v1013, 1.0
  %v1104 = vadd.f32 %v1015, 1.0
  %v1105 = vadd.f32 %v1017, 1.0
  %v1106 = vadd.f32 %v1019, 1.0
  %v1107 = vadd.f32 %v1021, 1.0
  %v1108 = vadd.f32 %v1023, 1.0
  %v1109 = vadd.f32 %v1025, 1.0
  %v1110 = vadd.f32 %v1027, 1.0
  %v1111 = vadd.f32 %v1029, 1.0
  %v1112 = vadd.f32 %v1031, 1.0
  %v1113 = vadd.f32 %v1033, 1.0
  %v1114 = vadd.f32 %v1035, 1.0
  %v1115 = vadd.f32 %v1037, 1.0
  %v1116 = vadd.f32 %v1039, 1.0
  %v1117 = vadd.f32 %v1041, 1.0
  %v1118 = vadd.f32 %v1043, 1.0
  %v1119 = vadd.f32 %v1045, 1.0
  %v1120 = vadd.f32 %v1047, 1.0
  %v1121 = vadd.f32 %v1049, 1.0
  %v1122 = vadd.f32 %v1051, 1.0
  %v1123 = vadd.f32 %v1053, 1.0
  %v1124 = vadd.f32 %v1055, 1.0
  %v1125 = vadd.f32 %v1057, 1.0
  %v1126 = vadd.f32 %v1059, 1.0
  %v1127 = vadd.f32 %v1061, 1.0
  %v1128 = vadd.f32 %v1063, 1.0
  %v1129 = vadd.f32 %v1065, 1.0
  %v1130 = vadd.f32 %v1067, 1.0
  %v1131 = vadd.f32 %v1069, 1.0
  %v1132 = vadd.f32 %v1071, 1.0
  %v1133 = vadd.f32 %v1073, 1.0
  %v1134 = vadd.f32 %v1075, 1.0
  %v1135 = vadd.f32 %v1077, 1.0
  %v1136 = vadd.f32 %v1079, 1.0
  %v1137 = vadd.f32 %v1081, 1.0
  %v1138 = vadd.f32 %v1083, 1.0
  %v1139 = vadd.f32 %v1085, 1.0
  %v1140 = vadd.f32 %v1087, 1.0
  %v1141 = vadd.f32 %v1089, 1.0
  %v1142 = vadd.f32 %v1091, 1.0
  %v1143 = vadd.f32 %v1093, 1.0
  %v1144 = vrcp.pop %v1094
  %v1145 = vmul.f32 1.0, %v1144
  %v1146 = vrcp.pop %v1095
  %v1147 = vmul.f32 1.0, %v1146
  %v1148 = vrcp.pop %v1096
  %v1149 = vmul.f32 1.0, %v1148
  %v1150 = vrcp.pop %v1097
  %v1151 = vmul.f32 1.0, %v1150
  %v1152 = vrcp.pop %v1098
  %v1153 = vmul.f32 1.0, %v1152
  %v1154 = vrcp.pop %v1099
  %v1155 = vmul.f32 1.0, %v1154
  %v1156 = vrcp.pop %v1100
  %v1157 = vmul.f32 1.0, %v1156
  %v1158 = vrcp.pop %v1101
  %v1159 = vmul.f32 1.0, %v1158
  %v1160 = vrcp.pop %v1102
  %v1161 = vmul.f32 1.0, %v1160
  %v1162 = vrcp.pop %v1103
  %v1163 = vmul.f32 1.0, %v1162
  %v1164 = vrcp.pop %v1104
  %v1165 = vmul.f32 1.0, %v1164
  %v1166 = vrcp.pop %v1105
  %v1167 = vmul.f32 1.0, %v1166
  %v1168 = vrcp.pop %v1106
  %v1169 = vmul.f32 1.0, %v1168
  %v1170 = vrcp.pop %v1107
  %v1171 = vmul.f32 1.0, %v1170
  %v1172 = vrcp.pop %v1108
  %v1173 = vmul.f32 1.0, %v1172
  %v1174 = vrcp.pop %v1109
  %v1175 = vmul.f32 1.0, %v1174
  %v1176 = vrcp.pop %v1110
  %v1177 = vmul.f32 1.0, %v1176
  %v1178 = vrcp.pop %v1111
  %v1179 = vmul.f32 1.0, %v1178
  %v1180 = vrcp.pop %v1112
  %v1181 = vmul.f32 1.0, %v1180
  %v1182 = vrcp.pop %v1113
  %v1183 = vmul.f32 1.0, %v1182
  %v1184 = vrcp.pop %v1114
  %v1185 = vmul.f32 1.0, %v1184
  %v1186 = vrcp.pop %v1115
  %v1187 = vmul.f32 1.0, %v1186
  %v1188 = vrcp.pop %v1116
  %v1189 = vmul.f32 1.0, %v1188
  %v1190 = vrcp.pop %v1117
  %v1191 = vmul.f32 1.0, %v1190
  %v1192 = vrcp.pop %v1118
  %v1193 = vmul.f32 1.0, %v1192
  %v1194 = vrcp.pop %v1119
  %v1195 = vmul.f32 1.0, %v1194
  %v1196 = vrcp.pop %v1120
  %v1197 = vmul.f32 1.0, %v1196
  %v1198 = vrcp.pop %v1121
  %v1199 = vmul.f32 1.0, %v1198
  %v1200 = vrcp.pop %v1122
  %v1201 = vmul.f32 1.0, %v1200
  %v1202 = vrcp.pop %v1123
  %v1203 = vmul.f32 1.0, %v1202
  %v1204 = vrcp.pop %v1124
  %v1205 = vmul.f32 1.0, %v1204
  %v1206 = vrcp.pop %v1125
  %v1207 = vmul.f32 1.0, %v1206
  %v1208 = vrcp.pop %v1126
  %v1209 = vmul.f32 1.0, %v1208
  %v1210 = vrcp.pop %v1127
  %v1211 = vmul.f32 1.0, %v1210
  %v1212 = vrcp.pop %v1128
  %v1213 = vmul.f32 1.0, %v1212
  %v1214 = vrcp.pop %v1129
  %v1215 = vmul.f32 1.0, %v1214
  %v1216 = vrcp.pop %v1130
  %v1217 = vmul.f32 1.0, %v1216
  %v1218 = vrcp.pop %v1131
  %v1219 = vmul.f32 1.0, %v1218
  %v1220 = vrcp.pop %v1132
  %v1221 = vmul.f32 1.0, %v1220
  %v1222 = vrcp.pop %v1133
  %v1223 = vmul.f32 1.0, %v1222
  %v1224 = vrcp.pop %v1134
  %v1225 = vmul.f32 1.0, %v1224
  %v1226 = vrcp.pop %v1135
  %v1227 = vmul.f32 1.0, %v1226
  %v1228 = vrcp.pop %v1136
  %v1229 = vmul.f32 1.0, %v1228
  %v1230 = vrcp.pop %v1137
  %v1231 = vmul.f32 1.0, %v1230
  %v1232 = vrcp.pop %v1138
  %v1233 = vmul.f32 1.0, %v1232
  %v1234 = vrcp.pop %v1139
  %v1235 = vmul.f32 1.0, %v1234
  %v1236 = vrcp.pop %v1140
  %v1237 = vmul.f32 1.0, %v1236
  %v1238 = vrcp.pop %v1141
  %v1239 = vmul.f32 1.0, %v1238
  %v1240 = vrcp.pop %v1142
  %v1241 = vmul.f32 1.0, %v1240
  %v1242 = vrcp.pop %v1143
  %v1243 = vmul.f32 1.0, %v1242
  %vm1244 = vcmask 7168
  %1245 = vst.msk [vmem:[%s5] sm:$0xff] %vm1244, %v1145
  %1246 = vst.msk [vmem:[%s5 + $0x8] sm:$0xff] %vm1244, %v1147
  %1247 = vst.msk [vmem:[%s5 + $0x10] sm:$0xff] %vm1244, %v1149
  %1248 = vst.msk [vmem:[%s5 + $0x18] sm:$0xff] %vm1244, %v1151
  %1249 = vst.msk [vmem:[%s5 + $0x20] sm:$0xff] %vm1244, %v1153
  %1250 = vst.msk [vmem:[%s5 + $0x28] sm:$0xff] %vm1244, %v1155
  %1251 = vst.msk [vmem:[%s5 + $0x30] sm:$0xff] %vm1244, %v1157
  %1252 = vst.msk [vmem:[%s5 + $0x38] sm:$0xff] %vm1244, %v1159
  %1253 = vst.msk [vmem:[%s5 + $0x40] sm:$0xff] %vm1244, %v1161
  %1254 = vst.msk [vmem:[%s5 + $0x48] sm:$0xff] %vm1244, %v1163
  %1255 = vst.msk [vmem:[%s5 + $0x50] sm:$0xff] %vm1244, %v1165
  %1256 = vst.msk [vmem:[%s5 + $0x58] sm:$0xff] %vm1244, %v1167
  %1257 = vst.msk [vmem:[%s5 + $0x60] sm:$0xff] %vm1244, %v1169
  %1258 = vst.msk [vmem:[%s5 + $0x68] sm:$0xff] %vm1244, %v1171
  %1259 = vst.msk [vmem:[%s5 + $0x70] sm:$0xff] %vm1244, %v1173
  %1260 = vst.msk [vmem:[%s5 + $0x78] sm:$0xff] %vm1244, %v1175
  %1261 = vst.msk [vmem:[%s5 + $0x80] sm:$0xff] %vm1244, %v1177
  %1262 = vst.msk [vmem:[%s5 + $0x88] sm:$0xff] %vm1244, %v1179
  %1263 = vst.msk [vmem:[%s5 + $0x90] sm:$0xff] %vm1244, %v1181
  %1264 = vst.msk [vmem:[%s5 + $0x98] sm:$0xff] %vm1244, %v1183
  %1265 = vst.msk [vmem:[%s5 + $0xa0] sm:$0xff] %vm1244, %v1185
  %1266 = vst.msk [vmem:[%s5 + $0xa8] sm:$0xff] %vm1244, %v1187
  %1267 = vst.msk [vmem:[%s5 + $0xb0] sm:$0xff] %vm1244, %v1189
  %1268 = vst.msk [vmem:[%s5 + $0xb8] sm:$0xff] %vm1244, %v1191
  %1269 = vst.msk [vmem:[%s5 + $0xc0] sm:$0xff] %vm1244, %v1193
  %1270 = vst.msk [vmem:[%s5 + $0xc8] sm:$0xff] %vm1244, %v1195
  %1271 = vst.msk [vmem:[%s5 + $0xd0] sm:$0xff] %vm1244, %v1197
  %1272 = vst.msk [vmem:[%s5 + $0xd8] sm:$0xff] %vm1244, %v1199
  %1273 = vst.msk [vmem:[%s5 + $0xe0] sm:$0xff] %vm1244, %v1201
  %1274 = vst.msk [vmem:[%s5 + $0xe8] sm:$0xff] %vm1244, %v1203
  %1275 = vst.msk [vmem:[%s5 + $0xf0] sm:$0xff] %vm1244, %v1205
  %1276 = vst.msk [vmem:[%s5 + $0xf8] sm:$0xff] %vm1244, %v1207
  %1277 = vst.msk [vmem:[%s5 + $0x100] sm:$0xff] %vm1244, %v1209
  %1278 = vst.msk [vmem:[%s5 + $0x108] sm:$0xff] %vm1244, %v1211
  %1279 = vst.msk [vmem:[%s5 + $0x110] sm:$0xff] %vm1244, %v1213
  %1280 = vst.msk [vmem:[%s5 + $0x118] sm:$0xff] %vm1244, %v1215
  %1281 = vst.msk [vmem:[%s5 + $0x120] sm:$0xff] %vm1244, %v1217
  %1282 = vst.msk [vmem:[%s5 + $0x128] sm:$0xff] %vm1244, %v1219
  %1283 = vst.msk [vmem:[%s5 + $0x130] sm:$0xff] %vm1244, %v1221
  %1284 = vst.msk [vmem:[%s5 + $0x138] sm:$0xff] %vm1244, %v1223
  %1285 = vst.msk [vmem:[%s5 + $0x140] sm:$0xff] %vm1244, %v1225
  %1286 = vst.msk [vmem:[%s5 + $0x148] sm:$0xff] %vm1244, %v1227
  %1287 = vst.msk [vmem:[%s5 + $0x150] sm:$0xff] %vm1244, %v1229
  %1288 = vst.msk [vmem:[%s5 + $0x158] sm:$0xff] %vm1244, %v1231
  %1289 = vst.msk [vmem:[%s5 + $0x160] sm:$0xff] %vm1244, %v1233
  %1290 = vst.msk [vmem:[%s5 + $0x168] sm:$0xff] %vm1244, %v1235
  %1291 = vst.msk [vmem:[%s5 + $0x170] sm:$0xff] %vm1244, %v1237
  %1292 = vst.msk [vmem:[%s5 + $0x178] sm:$0xff] %vm1244, %v1239
  %1293 = vst.msk [vmem:[%s5 + $0x180] sm:$0xff] %vm1244, %v1241
  %1294 = vst.msk [vmem:[%s5 + $0x188] sm:$0xff] %vm1244, %v1243
  // Predicated region
  $region22: #{point_score_forward.1} parent=0 // pred_check
    _
  $region23: #{point_score_forward.1} parent=0 // pred_check_branch
    %1296 = sbr.rel (0) target = $region25
  $region24: #{point_score_forward.1} parent=0 // pred_region
    _
  $region25: #{point_score_forward.1} parent=0 // pred_fallthru
    _
  // Predicated region
  $region26: #{point_score_forward.1} parent=0 // pred_check
    _
  $region27: #{point_score_forward.1} parent=0 // pred_check_branch
    %1298 = sbr.rel (0) target = $region29
  $region28: #{point_score_forward.1} parent=0 // pred_region
    _
  $region29: #{point_score_forward.1} parent=0 // pred_fallthru
    _

</llo_original>
